<compile_context>
chip_gen: v7x
topology: tpu7x:2x2x1
jax: 0.10.0
libtpu: 0.0.40
codegen_flags: <defaults>
</compile_context>

<pallas_src>
import functools

import jax
import jax.numpy as jnp
from jax.experimental import pallas as pl
from jax.experimental.pallas import tpu as pltpu

_VMEM_LIMIT = 48 * 1024 * 1024  # safe on v5e/v6e (128 MiB) and v7x (64 MiB)


# ----------------------------------------------------------------------------
# Tile selection helpers
# ----------------------------------------------------------------------------
def _round_up(x, m):
    return ((x + m - 1) // m) * m


def _pick_m_tile(m):
    """Largest M tile (<=512), multiples of 16 (bf16 sublane packing),
    accepting modest zero padding instead of dropping to tiny tiles."""
    mp16 = _round_up(m, 16)
    if mp16 < 512:
        return mp16, mp16
    base = _round_up(m, 128)
    for t in (512, 256):
        mp = _round_up(m, t)
        if 3 * mp <= 4 * base:          # <= ~33% padding over 128-aligned size
            return t, mp
    return 128, base


def _pick_k_tile(k):
    """Bias K tiles toward 256/512 multiples (keeps 256x256 MXU passes full
    on v6e/v7x); accept <=25% zero padding for it."""
    base = _round_up(k, 128)
    for t in (512, 256):
        kp = _round_up(k, t)
        if 4 * kp <= 5 * base:
            return t, kp
    return 128, base


def _pick_n_tile(n):
    np_ = _round_up(n, 128)
    for t in (512, 256, 128):
        if np_ % t == 0:
            return t, np_
    return 128, np_


def _pad2(a, rows, cols):
    r, c = a.shape
    if r == rows and c == cols:
        return a
    return jnp.pad(a, ((0, rows - r), (0, cols - c)))


# ----------------------------------------------------------------------------
# Pallas kernels
# ----------------------------------------------------------------------------
def _mm_kernel(*refs, relu, has_residual):
    """Tiled matmul with K-reduction accumulator; fused bias/residual/ReLU."""
    if has_residual:
        x_ref, w_ref, b_ref, r_ref, o_ref, acc_ref = refs
    else:
        x_ref, w_ref, b_ref, o_ref, acc_ref = refs
        r_ref = None
    k = pl.program_id(2)

    @pl.when(k == 0)
    def _():
        acc_ref[...] = jnp.zeros_like(acc_ref)

    acc_ref[...] += jnp.dot(x_ref[...], w_ref[...],
                            preferred_element_type=jnp.float32)

    @pl.when(k == pl.num_programs(2) - 1)
    def _():
        out = acc_ref[...] + b_ref[...]
        if has_residual:
            out = out + r_ref[...].astype(jnp.float32)
        if relu:
            out = jnp.maximum(out, 0.0)
        o_ref[...] = out.astype(o_ref.dtype)


@functools.partial(jax.jit, static_argnames=("relu", "out_dtype"))
def matmul_bias(x, w, b, residual=None, *, relu=False, out_dtype=jnp.bfloat16):
    """[M,K] @ [K,N] + b[N] (+residual[M,N]) (+ReLU); f32 MXU accumulation,
    bf16 (or f32) output written straight from the epilogue."""
    m, k = x.shape
    _, n = w.shape
    tm, mp = _pick_m_tile(m)
    tk, kp = _pick_k_tile(k)
    tn, np_ = _pick_n_tile(n)

    # Keep >=2 parallel output blocks where cheaply possible so v7x's second
    # TensorCore ("parallel" grid axes) is not idle; harmless on v5e/v6e.
    if (mp // tm) * (np_ // tn) < 2:
        if tn >= 256:
            tn //= 2
        elif tm >= 32 and tm % 32 == 0:
            tm //= 2

    xp = _pad2(x, mp, kp)
    wp = _pad2(w, kp, np_)
    bp = jnp.pad(b.astype(jnp.float32), (0, np_ - n)).reshape(1, np_)

    in_specs = [
        pl.BlockSpec((tm, tk), lambda i, j, kk: (i, kk)),
        pl.BlockSpec((tk, tn), lambda i, j, kk: (kk, j)),
        pl.BlockSpec((1, tn), lambda i, j, kk: (0, j)),
    ]
    args = [xp, wp, bp]
    has_res = residual is not None
    if has_res:
        # Residual stays in bf16; the add is done against the f32 accumulator.
        rp = _pad2(residual, mp, np_)
        in_specs.append(pl.BlockSpec((tm, tn), lambda i, j, kk: (i, j)))
        args.append(rp)

    n_m, n_n = mp // tm, np_ // tn
    out_itemsize = jnp.dtype(out_dtype).itemsize
    bytes_accessed = (xp.size * xp.dtype.itemsize * n_n          # x re-read per N tile
                      + wp.size * wp.dtype.itemsize * n_m        # w re-read per M tile
                      + bp.size * 4
                      + mp * np_ * out_itemsize
                      + (rp.size * rp.dtype.itemsize if has_res else 0))

    out = pl.pallas_call(
        functools.partial(_mm_kernel, relu=relu, has_residual=has_res),
        out_shape=jax.ShapeDtypeStruct((mp, np_), out_dtype),
        grid_spec=pltpu.PrefetchScalarGridSpec(
            num_scalar_prefetch=0,
            grid=(mp // tm, np_ // tn, kp // tk),
            in_specs=in_specs,
            out_specs=pl.BlockSpec((tm, tn), lambda i, j, kk: (i, j)),
            scratch_shapes=[pltpu.VMEM((tm, tn), jnp.float32)]),
        compiler_params=pltpu.CompilerParams(
            dimension_semantics=("parallel", "parallel", "arbitrary"),
            vmem_limit_bytes=_VMEM_LIMIT),
        cost_estimate=pl.CostEstimate(
            flops=2 * mp * np_ * kp,
            transcendentals=0,
            bytes_accessed=bytes_accessed),
    )(*args)
    return out[:m, :n]


def _max_taps_kernel(*refs):
    taps, o_ref = refs[:-1], refs[-1]
    acc = taps[0][...]
    for r in taps[1:]:
        acc = jnp.maximum(acc, r[...])
    o_ref[...] = acc


@jax.jit
def _max_over_taps(*taps):
    """Elementwise max of the KxK window taps, tiled over rows (bf16)."""
    m, c = taps[0].shape
    tm, mp = _pick_m_tile(m)
    padded = [t if mp == m else jnp.pad(t, ((0, mp - m), (0, 0))) for t in taps]
    spec = pl.BlockSpec((tm, c), lambda i: (i, 0))
    out = pl.pallas_call(
        _max_taps_kernel,
        out_shape=jax.ShapeDtypeStruct((mp, c), taps[0].dtype),
        grid_spec=pltpu.PrefetchScalarGridSpec(
            num_scalar_prefetch=0, grid=(mp // tm,),
            in_specs=[spec] * len(taps),
            out_specs=spec),
        compiler_params=pltpu.CompilerParams(
            dimension_semantics=("parallel",),
            vmem_limit_bytes=_VMEM_LIMIT),
    )(*padded)
    return out[:m]


def _mean_pool_kernel(x_ref, o_ref):
    o_ref[...] = jnp.mean(x_ref[...].astype(jnp.float32),
                          axis=1).astype(o_ref.dtype)


@jax.jit
def global_avg_pool(x_nhw_c):
    """AdaptiveAvgPool2d(1): mean over spatial axis of [N, H*W, C].
    The final activation is tiny, so a single block avoids per-grid-step
    overhead and an extra HBM round trip before the embed matmul."""
    n, hw, c = x_nhw_c.shape
    return pl.pallas_call(
        _mean_pool_kernel,
        out_shape=jax.ShapeDtypeStruct((n, c), jnp.float32),
        grid_spec=pltpu.PrefetchScalarGridSpec(
            num_scalar_prefetch=0, grid=(1,),
            in_specs=[pl.BlockSpec((n, hw, c), lambda i: (0, 0, 0))],
            out_specs=pl.BlockSpec((n, c), lambda i: (0, 0))),
        compiler_params=pltpu.CompilerParams(
            dimension_semantics=("arbitrary",),
            vmem_limit_bytes=_VMEM_LIMIT),
    )(x_nhw_c)


# ----------------------------------------------------------------------------
# Conv / pool wrappers (im2col glue in JAX, matmul/reduce in Pallas)
# ----------------------------------------------------------------------------
def conv_bn(x_nhwc, p, stride, pad, relu, residual=None):
    """conv2d (no bias) + folded eval-mode BatchNorm (+ReLU, +fused residual).
    Weights already have BN scale folded and are bf16 [KH*KW*Cin, Cout]."""
    kh, kw, cin, cout = p["kh"], p["kw"], p["cin"], p["cout"]
    x_nhwc = x_nhwc.astype(jnp.bfloat16)   # no-op once activations flow bf16
    n, h, wd, _ = x_nhwc.shape

    if kh == 1 and kw == 1:
        # 1x1 conv: no patch extraction, just (strided) reshape.
        xs = x_nhwc if stride == 1 else x_nhwc[:, ::stride, ::stride, :]
        oh, ow = xs.shape[1], xs.shape[2]
        patches = xs.reshape(n * oh * ow, cin)
    else:
        # bf16 im2col halves the patch-tensor HBM traffic.
        # TODO(synk): im2col still replicates the activation KH*KW x in HBM;
        # a tap-streaming conv kernel (strided windows read directly from the
        # padded NHWC activation) would remove that copy entirely.
        xpad = jnp.pad(x_nhwc, ((0, 0), (pad, pad), (pad, pad), (0, 0)))
        oh = (h + 2 * pad - kh) // stride + 1
        ow = (wd + 2 * pad - kw) // stride + 1
        cols = [
            xpad[:, i:i + stride * (oh - 1) + 1:stride,
                 j:j + stride * (ow - 1) + 1:stride, :]
            for i in range(kh) for j in range(kw)
        ]
        patches = jnp.concatenate(cols, axis=-1).reshape(
            n * oh * ow, kh * kw * cin)

    res2d = None if residual is None else residual.reshape(n * oh * ow, cout)
    out = matmul_bias(patches, p["w"], p["bias"], res2d, relu=relu)
    return out.reshape(n, oh, ow, cout)


def maxpool_3x3_s2(x_nhwc):
    n, h, wd, c = x_nhwc.shape
    k, s, pad = 3, 2, 1
    x_nhwc = x_nhwc.astype(jnp.bfloat16)
    xp = jnp.pad(x_nhwc, ((0, 0), (pad, pad), (pad, pad), (0, 0)),
                 constant_values=-jnp.inf)
    oh = (h + 2 * pad - k) // s + 1
    ow = (wd + 2 * pad - k) // s + 1
    taps = [
        xp[:, i:i + s * (oh - 1) + 1:s, j:j + s * (ow - 1) + 1:s, :]
        for i in range(k) for j in range(k)
    ]
    # Reshape taps to a lane-dense layout (last dim >=128) so stores are
    # full-width instead of masked 64-lane partial stores.
    total = n * oh * ow * c
    lane = next((l for l in (512, 256, 128) if total % l == 0), None)
    if lane is None:
        flat = [t.reshape(n * oh * ow, c) for t in taps]   # fallback (masked)
    else:
        flat = [t.reshape(total // lane, lane) for t in taps]
    return _max_over_taps(*flat).reshape(n, oh, ow, c)


# ----------------------------------------------------------------------------
# Parameter construction (deterministic, ResNet-50 shapes)
# ----------------------------------------------------------------------------
class _KeyGen:
    def __init__(self, key):
        self._key = key

    def next(self):
        self._key, k = jax.random.split(self._key)
        return k


def _make_conv_bn(kg, kh, kw, cin, cout):
    """Conv weight with eval-mode BN folded in at build time (bf16)."""
    fan_in = kh * kw * cin
    w = jax.random.normal(kg.next(), (kh, kw, cin, cout), jnp.float32)
    w = w * jnp.sqrt(2.0 / fan_in)
    gamma = jax.random.uniform(kg.next(), (cout,), jnp.float32, 0.5, 1.0)
    beta = jax.random.normal(kg.next(), (cout,), jnp.float32) * 0.1
    mean = jax.random.normal(kg.next(), (cout,), jnp.float32) * 0.1
    var = jax.random.uniform(kg.next(), (cout,), jnp.float32, 0.5, 1.5)
    eps = 1e-5
    scale = gamma / jnp.sqrt(var + eps)   # fold BN: y = conv(x)*scale + bias
    bias = beta - mean * scale
    w_folded = (w * scale).astype(jnp.bfloat16).reshape(kh * kw * cin, cout)
    return {"w": w_folded, "bias": bias,
            "kh": kh, "kw": kw, "cin": cin, "cout": cout}


def build_encoder_params(embed_size, key):
    kg = _KeyGen(key)
    params = {"stem": _make_conv_bn(kg, 7, 7, 3, 64)}
    layers = []
    in_c = 64
    for width, nblocks, stride in [(64, 3, 1), (128, 4, 2),
                                   (256, 6, 2), (512, 3, 2)]:
        blocks = []
        for b in range(nblocks):
            s = stride if b == 0 else 1
            blk = {
                "stride": s,
                "conv1": _make_conv_bn(kg, 1, 1, in_c, width),
                "conv2": _make_conv_bn(kg, 3, 3, width, width),
                "conv3": _make_conv_bn(kg, 1, 1, width, width * 4),
            }
            if s != 1 or in_c != width * 4:
                blk["down"] = _make_conv_bn(kg, 1, 1, in_c, width * 4)
            in_c = width * 4
            blocks.append(blk)
        layers.append(blocks)
    params["layers"] = layers
    # Final embed kept in f32: it is tiny ([N,2048]@[2048,E]); accuracy-critical.
    params["embed_w"] = (jax.random.normal(kg.next(), (2048, embed_size),
                                           jnp.float32) / jnp.sqrt(2048.0))
    params["embed_b"] = jax.random.normal(kg.next(), (embed_size,),
                                          jnp.float32) * 0.01
    return params


# ----------------------------------------------------------------------------
# EncoderCNN forward
# ----------------------------------------------------------------------------
def encoder_cnn_forward(params, images_nchw):
    """images: [N, 3, H, W] (PyTorch NCHW) -> features: [N, embed_size]."""
    x = jnp.transpose(images_nchw.astype(jnp.float32), (0, 2, 3, 1))  # NHWC

    # stem: conv7x7/s2 + BN + ReLU + maxpool3x3/s2   (bf16 activations out)
    x = conv_bn(x, params["stem"], stride=2, pad=3, relu=True)
    x = maxpool_3x3_s2(x)

    # layer1..layer4: bottleneck residual blocks.
    # Residual add + final ReLU are fused into the conv3 matmul epilogue.
    for blocks in params["layers"]:
        for blk in blocks:
            s = blk["stride"]
            if "down" in blk:
                identity = conv_bn(x, blk["down"], stride=s, pad=0, relu=False)
            else:
                identity = x
            y = conv_bn(x, blk["conv1"], stride=1, pad=0, relu=True)
            y = conv_bn(y, blk["conv2"], stride=s, pad=1, relu=True)
            x = conv_bn(y, blk["conv3"], stride=1, pad=0, relu=True,
                        residual=identity)

    # AdaptiveAvgPool2d(1) -> flatten -> Linear(2048, embed_size)
    n, h, w, c = x.shape
    feats = global_avg_pool(x.reshape(n, h * w, c))          # [N, 2048] f32
    return matmul_bias(feats, params["embed_w"], params["embed_b"],
                       relu=False, out_dtype=jnp.float32)    # [N, embed_size]


# TODO(synk): pretrained torchvision ResNet-50 weights cannot be loaded here;
# parameters are deterministic random stand-ins with the exact same shapes.

if __name__ == "__main__":
    embed_size = 64
    key = jax.random.PRNGKey(0)
    pkey, dkey = jax.random.split(key)

    params = build_encoder_params(embed_size, pkey)
    images = jax.random.normal(dkey, (2, 3, 32, 32), jnp.float32)  # NCHW

    features = encoder_cnn_forward(params, images)
    features = jax.block_until_ready(features)

    assert features.shape == (2, embed_size), features.shape
    assert bool(jnp.all(jnp.isfinite(features)))
    print("KERNEL_OK")
</pallas_src>

<mosaic_0001>
module attributes {stable_mosaic.version = 11 : i64} {
  func.func @_mm_kernel(%arg0: i32, %arg1: i32, %arg2: i32, %arg3: memref<256x256xbf16, #tpu.memory_space<vmem>>, %arg4: memref<256x128xbf16, #tpu.memory_space<vmem>>, %arg5: memref<1x128xf32, #tpu.memory_space<vmem>>, %arg6: memref<256x128xbf16, #tpu.memory_space<vmem>>, %arg7: memref<256x128xf32, #tpu.memory_space<vmem>>) attributes {dimension_semantics = [#tpu.dimension_semantics<parallel>, #tpu.dimension_semantics<parallel>, #tpu.dimension_semantics<arbitrary>], iteration_bounds = array<i64: 2, 1, 1>, scalar_prefetch = 0 : i64, scratch_operands = 1 : i64, tpu.core_type = #tpu.core_type<tc>, window_params = [{transform_indices = @transform_0, window_bounds = array<i64: 256, 256>}, {transform_indices = @transform_1, window_bounds = array<i64: 256, 128>}, {transform_indices = @transform_2, window_bounds = array<i64: 1, 128>}, {transform_indices = @transform_3, window_bounds = array<i64: 256, 128>}]} {
    %c0_i32 = arith.constant 0 : i32
    %0 = arith.cmpi eq, %arg2, %c0_i32 : i32
    %1 = arith.extui %0 : i1 to i32
    %c0_i32_0 = arith.constant 0 : i32
    %2 = arith.cmpi ne, %1, %c0_i32_0 : i32
    scf.if %2 {
      %cst_10 = arith.constant 0.000000e+00 : f32
      %12 = vector.broadcast %cst_10 : f32 to vector<256x128xf32>
      %c0_11 = arith.constant 0 : index
      %c0_12 = arith.constant 0 : index
      %13 = vector.load %arg7[%c0_11, %c0_12] : memref<256x128xf32, #tpu.memory_space<vmem>>, vector<256x128xf32>
      tpu.vector_store %arg7[%c0_11, %c0_12], %12 {strides = array<i32>} : memref<256x128xf32, #tpu.memory_space<vmem>>, vector<256x128xf32>,
    } else {
    }
    %c0 = arith.constant 0 : index
    %c0_1 = arith.constant 0 : index
    %3 = vector.load %arg7[%c0, %c0_1] : memref<256x128xf32, #tpu.memory_space<vmem>>, vector<256x128xf32>
    %c0_2 = arith.constant 0 : index
    %c0_3 = arith.constant 0 : index
    %4 = vector.load %arg3[%c0_2, %c0_3] : memref<256x256xbf16, #tpu.memory_space<vmem>>, vector<256x256xbf16>
    %c0_4 = arith.constant 0 : index
    %c0_5 = arith.constant 0 : index
    %5 = vector.load %arg4[%c0_4, %c0_5] : memref<256x128xbf16, #tpu.memory_space<vmem>>, vector<256x128xbf16>
    %cst = arith.constant dense<0.000000e+00> : vector<256x128xf32>
    %6 = tpu.matmul %4, %5, %cst {dimension_numbers = #tpu.dot_dimension_numbers<[1], [0], [0], [1], [0, 0, 1, 1], [], []>} : vector<256x256xbf16>, vector<256x128xbf16>, vector<256x128xf32> -> vector<256x128xf32>
    %7 = arith.addf %3, %6 : vector<256x128xf32>
    %c0_6 = arith.constant 0 : index
    %c0_7 = arith.constant 0 : index
    %8 = vector.load %arg7[%c0_6, %c0_7] : memref<256x128xf32, #tpu.memory_space<vmem>>, vector<256x128xf32>
    tpu.vector_store %arg7[%c0_6, %c0_7], %7 {strides = array<i32>} : memref<256x128xf32, #tpu.memory_space<vmem>>, vector<256x128xf32>,
    %c0_i32_8 = arith.constant 0 : i32
    %9 = arith.cmpi eq, %arg2, %c0_i32_8 : i32
    %10 = arith.extui %9 : i1 to i32
    %c0_i32_9 = arith.constant 0 : i32
    %11 = arith.cmpi ne, %10, %c0_i32_9 : i32
    scf.if %11 {
      %c0_10 = arith.constant 0 : index
      %c0_11 = arith.constant 0 : index
      %12 = vector.load %arg7[%c0_10, %c0_11] : memref<256x128xf32, #tpu.memory_space<vmem>>, vector<256x128xf32>
      %c0_12 = arith.constant 0 : index
      %c0_13 = arith.constant 0 : index
      %13 = vector.load %arg5[%c0_12, %c0_13] : memref<1x128xf32, #tpu.memory_space<vmem>>, vector<1x128xf32>
      %14 = vector.broadcast %13 : vector<1x128xf32> to vector<256x128xf32>
      %15 = arith.addf %12, %14 : vector<256x128xf32>
      %cst_14 = arith.constant 0.000000e+00 : f32
      %16 = vector.broadcast %cst_14 : f32 to vector<256x128xf32>
      %17 = arith.maximumf %15, %16 : vector<256x128xf32>
      %18 = arith.truncf %17 : vector<256x128xf32> to vector<256x128xbf16>
      %c0_15 = arith.constant 0 : index
      %c0_16 = arith.constant 0 : index
      %19 = vector.load %arg6[%c0_15, %c0_16] : memref<256x128xbf16, #tpu.memory_space<vmem>>, vector<256x128xbf16>
      tpu.vector_store %arg6[%c0_15, %c0_16], %18 {strides = array<i32>} : memref<256x128xbf16, #tpu.memory_space<vmem>>, vector<256x128xbf16>,
    } else {
    }
    return
  }
  func.func @transform_0(%arg0: i32, %arg1: i32, %arg2: i32) -> (i32, i32) {
    %c0_i32 = arith.constant 0 : i32
    return %arg0, %arg2 : i32, i32
  }
  func.func @transform_1(%arg0: i32, %arg1: i32, %arg2: i32) -> (i32, i32) {
    %c0_i32 = arith.constant 0 : i32
    return %arg2, %arg1 : i32, i32
  }
  func.func @transform_2(%arg0: i32, %arg1: i32, %arg2: i32) -> (i32, i32) {
    %c0_i32 = arith.constant 0 : i32
    %c0_i32_0 = arith.constant 0 : i32
    return %c0_i32, %arg1 : i32, i32
  }
  func.func @transform_3(%arg0: i32, %arg1: i32, %arg2: i32) -> (i32, i32) {
    %c0_i32 = arith.constant 0 : i32
    return %arg0, %arg1 : i32, i32
  }
}

</mosaic_0001>

<llo_original>
// kernel: matmul_bias.1
$region0: #{matmul_bias.1}
  #allocation0 [shape = 'u32[]', space=smem, size = 0x4, offset = 0x4, fixed_abs, tag = 'smem constant byte address 0x4 - core index']
  #allocation1 [shape = 'u32[144,128]{1,0:T(1,128)}', space=vmem, size = 0x12000, scoped, tag = 'internal scratch']
  #allocation2 [shape = 'f32[256,128]{1,0:T(8,128)}', space=vmem, size = 0x20000, scoped, tag = 'scratch operand']
  %s0 = inlined_call_operand.vmem [shape: bf16[512,256], index: 0, kind: input, shape index: {}]
  %s1 = inlined_call_operand.vmem [shape: bf16[256,128], index: 1, kind: input, shape index: {}]
  %s2 = inlined_call_operand.vmem [shape: f32[1,128], index: 2, kind: input, shape index: {}]
  %s3 = inlined_call_operand.vmem [shape: bf16[512,128], index: 3, kind: output, shape index: {}]
  %s4 = sld [smem:[#allocation0]]
  $region53: #{matmul_bias.1} parent=0
    _
  %s6 = ssub.s32 1, %s4
  %s7 = scalar_select 0, %s6, %s4
  loop: start=0, step=1, limit=4
  $region2: #{matmul_bias.1} parent=0 // loop_pre_header
    _
  $region3: #{matmul_bias.1} parent=0 // loop_header
    %s9 = sphi 0, %s13
    %p10 = scmp.ge.s32.totalorder %s9, 4
    %s16 = sphi 0, %s35
    %s17 = sphi 0, %s31
    %s18 = sphi 0, %s27
    %s19 = sphi 0, %s16
    %s20 = sphi 0, %s17
    %s21 = sphi 0, %s18
    %s22 = sphi 0, %s19
    %s23 = sphi 0, %s20
    %s24 = sphi 0, %s21
    %s40 = sphi 0, %s42
    %s43 = sphi 0, %s40
    %s44 = sphi 0, %s43
    %s60 = sphi 0, %s44
    %s68 = sphi 0, %s70
    %s71 = sphi 0, %s68
    %s72 = sphi 0, %s71
    %s88 = sphi 0, %s72
    %s94 = sphi 0, %s96
    %s97 = sphi 0, %s94
    %s98 = sphi 0, %s97
    %s114 = sphi 0, %s98
    %s122 = sphi 0, %s124
    %s125 = sphi 0, %s122
    %s126 = sphi 0, %s125
    %s142 = sphi 0, %s126
  $region4: #{matmul_bias.1} parent=0 // loop_header_branch
    %12 = sbr.rel (%p10) target = $region8
  $region5: #{matmul_bias.1} parent=0 // loop_body
    %s14 = ssub.s32 %s9, 1
    %s15 = ssub.s32 %s9, 2
    %s25 = sadd.s32 1, %s18
    %p26 = scmp.ge.s32.totalorder %s25, 1
    %s27 = scalar_select %p26, 0, %s25
    %s28 = sadd.s32 1, %s17
    %s29 = scalar_select %p26, %s28, %s17
    %p30 = scmp.ge.s32.totalorder %s29, 1
    %s31 = scalar_select %p30, 0, %s29
    %s32 = sadd.s32 1, %s16
    %s33 = scalar_select %p30, %s32, %s16
    %p34 = scmp.ge.s32.totalorder %s33, 2
    %s35 = scalar_select %p34, 0, %s33
    %s36 = ssub.s32 %s16, %s35
    %s37 = ssub.s32 %s18, %s27
    %s38 = sor.u32 %s36, %s37
    %p39 = scmp.eq.s32.totalorder %s38, 0
    %s41 = sadd.s32 %s40, 1
    %s42 = scalar_select %p39, %s40, %s41
    %p45 = pneg %p39
    %p46 = scmp.eq.s32.totalorder %s9, 1
    %p47 = por %p45, %p46
    %p48 = scmp.ne.s32.totalorder %s40, %s43
    %p49 = scmp.eq.s32.totalorder %s9, 0
    %p50 = por %p48, %p49
    %p51 = scmp.ne.s32.totalorder %s40, %s43
    %p52 = scmp.eq.s32.totalorder %s14, 1
    %p53 = por %p51, %p52
    %p54 = scmp.ne.s32.totalorder %s43, %s44
    %p55 = scmp.eq.s32.totalorder %s14, 0
    %p56 = por %p54, %p55
    %p57 = scmp.ne.s32.totalorder %s43, %s44
    %p58 = scmp.eq.s32.totalorder %s15, 1
    %p59 = por %p57, %p58
    %p61 = scmp.ne.s32.totalorder %s44, %s60
    %p62 = scmp.eq.s32.totalorder %s15, 0
    %p63 = por %p61, %p62
    %s64 = ssub.s32 %s18, %s27
    %s65 = ssub.s32 %s17, %s31
    %s66 = sor.u32 %s64, %s65
    %p67 = scmp.eq.s32.totalorder %s66, 0
    %s69 = sadd.s32 %s68, 1
    %s70 = scalar_select %p67, %s68, %s69
    %p73 = pneg %p67
    %p74 = scmp.eq.s32.totalorder %s9, 1
    %p75 = por %p73, %p74
    %p76 = scmp.ne.s32.totalorder %s68, %s71
    %p77 = scmp.eq.s32.totalorder %s9, 0
    %p78 = por %p76, %p77
    %p79 = scmp.ne.s32.totalorder %s68, %s71
    %p80 = scmp.eq.s32.totalorder %s14, 1
    %p81 = por %p79, %p80
    %p82 = scmp.ne.s32.totalorder %s71, %s72
    %p83 = scmp.eq.s32.totalorder %s14, 0
    %p84 = por %p82, %p83
    %p85 = scmp.ne.s32.totalorder %s71, %s72
    %p86 = scmp.eq.s32.totalorder %s15, 1
    %p87 = por %p85, %p86
    %p89 = scmp.ne.s32.totalorder %s72, %s88
    %p90 = scmp.eq.s32.totalorder %s15, 0
    %p91 = por %p89, %p90
    %s92 = ssub.s32 %s17, %s31
    %p93 = scmp.eq.s32.totalorder %s92, 0
    %s95 = sadd.s32 %s94, 1
    %s96 = scalar_select %p93, %s94, %s95
    %p99 = pneg %p93
    %p100 = scmp.eq.s32.totalorder %s9, 1
    %p101 = por %p99, %p100
    %p102 = scmp.ne.s32.totalorder %s94, %s97
    %p103 = scmp.eq.s32.totalorder %s9, 0
    %p104 = por %p102, %p103
    %p105 = scmp.ne.s32.totalorder %s94, %s97
    %p106 = scmp.eq.s32.totalorder %s14, 1
    %p107 = por %p105, %p106
    %p108 = scmp.ne.s32.totalorder %s97, %s98
    %p109 = scmp.eq.s32.totalorder %s14, 0
    %p110 = por %p108, %p109
    %p111 = scmp.ne.s32.totalorder %s97, %s98
    %p112 = scmp.eq.s32.totalorder %s15, 1
    %p113 = por %p111, %p112
    %p115 = scmp.ne.s32.totalorder %s98, %s114
    %p116 = scmp.eq.s32.totalorder %s15, 0
    %p117 = por %p115, %p116
    %s118 = ssub.s32 %s16, %s35
    %s119 = ssub.s32 %s17, %s31
    %s120 = sor.u32 %s118, %s119
    %p121 = scmp.eq.s32.totalorder %s120, 0
    %s123 = sadd.s32 %s122, 1
    %s124 = scalar_select %p121, %s122, %s123
    %p127 = pneg %p121
    %p128 = scmp.eq.s32.totalorder %s9, 1
    %p129 = por %p127, %p128
    %p130 = scmp.ne.s32.totalorder %s122, %s125
    %p131 = scmp.eq.s32.totalorder %s9, 0
    %p132 = por %p130, %p131
    %p133 = scmp.ne.s32.totalorder %s122, %s125
    %p134 = scmp.eq.s32.totalorder %s14, 1
    %p135 = por %p133, %p134
    %p136 = scmp.ne.s32.totalorder %s125, %s126
    %p137 = scmp.eq.s32.totalorder %s14, 0
    %p138 = por %p136, %p137
    %p139 = scmp.ne.s32.totalorder %s125, %s126
    %p140 = scmp.eq.s32.totalorder %s15, 1
    %p141 = por %p139, %p140
    %p143 = scmp.ne.s32.totalorder %s126, %s142
    %p144 = scmp.eq.s32.totalorder %s15, 0
    %p145 = por %p143, %p144
    %p146 = scmp.le.s32.totalorder 1, %s9
    %p147 = scmp.lt.s32.totalorder %s9, 3
    %p148 = pnand %p146, %p147
    %p149 = pneg %p148
    // Predicated region
    $region9: #{matmul_bias.1} parent=5 // pred_check
      _
    $region10: #{matmul_bias.1} parent=5 // pred_check_branch
      %151 = sbr.rel (%p148) target = $region12
    $region11: #{matmul_bias.1} parent=5 // pred_region
      %s152 = ssub.s32 %s9, 1
      // Predicated region
      $region13: #{matmul_bias.1} parent=11 // pred_check
        %p153 = pneg %p84
      $region14: #{matmul_bias.1} parent=11 // pred_check_branch
        %155 = sbr.rel (%p153) target = $region16
      $region15: #{matmul_bias.1} parent=11 // pred_region
        %s156 = smul.u32 32, %s21
        %p157 = scmp.lt.s32.totalorder %s156, 31
        %s158 = scalar_select %p157, %s156, 31
        %p159 = scmp.lt.s32.totalorder %s20, 0
        %s160 = scalar_select %p159, %s20, 0
        %s161 = sadd.s32 %s160, %s158
        %s162 = smul.addr %s161, 4
        %s163 = scalar_lea.vmem %s1, %s162
        %s164 = smul.u32 32, %s21
      $region16: #{matmul_bias.1} parent=11 // pred_fallthru
        _
      // Predicated region
      $region17: #{matmul_bias.1} parent=11 // pred_check
        %p165 = pneg %p110
      $region18: #{matmul_bias.1} parent=11 // pred_check_branch
        %167 = sbr.rel (%p165) target = $region20
      $region19: #{matmul_bias.1} parent=11 // pred_region
        %p168 = scmp.lt.s32.totalorder %s20, 0
        %s169 = scalar_select %p168, %s20, 0
        %s170 = scalar_lea.vmem %s2, %s169
      $region20: #{matmul_bias.1} parent=11 // pred_fallthru
        _
    $region12: #{matmul_bias.1} parent=5 // pred_fallthru
      _
    %p171 = scmp.lt.s32.totalorder %s9, 2
    // Predicated region
    $region21: #{matmul_bias.1} parent=5 // pred_check
      %p172 = pneg %p171
    $region22: #{matmul_bias.1} parent=5 // pred_check_branch
      %174 = sbr.rel (%p172) target = $region24
    $region23: #{matmul_bias.1} parent=5 // pred_region
      // Predicated region
      $region25: #{matmul_bias.1} parent=23 // pred_check
        %p175 = pneg %p50
      $region26: #{matmul_bias.1} parent=23 // pred_check_branch
        %177 = sbr.rel (%p175) target = $region28
      $region27: #{matmul_bias.1} parent=23 // pred_region
        %s178 = smul.u32 32, %s16
        %s179 = smul.u32 2, %s18
        %p180 = scmp.lt.s32.totalorder %s178, 63
        %s181 = scalar_select %p180, %s178, 63
        %p182 = scmp.lt.s32.totalorder %s179, 1
        %s183 = scalar_select %p182, %s179, 1
        %s184 = smul.addr %s181, 2
        %s185 = sadd.s32 %s183, %s184
        %s186 = smul.addr %s185, 4
        %s187 = scalar_lea.vmem %s0, %s186
        %s188 = smul.u32 32, %s16
        %s189 = smul.u32 2, %s18
      $region28: #{matmul_bias.1} parent=23 // pred_fallthru
        _
    $region24: #{matmul_bias.1} parent=5 // pred_fallthru
      _
    %p190 = scmp.le.s32.totalorder 1, %s9
    %p191 = scmp.lt.s32.totalorder %s9, 3
    %p192 = pnand %p190, %p191
    %p193 = pneg %p192
    // Predicated region
    $region29: #{matmul_bias.1} parent=5 // pred_check
      _
    $region30: #{matmul_bias.1} parent=5 // pred_check_branch
      %195 = sbr.rel (%p192) target = $region32
    $region31: #{matmul_bias.1} parent=5 // pred_region
      %s196 = ssub.s32 %s9, 1
      %s197 = smul.u32 32, %s19
      %s198 = smul.u32 2, %s21
      %p199 = scmp.lt.s32.totalorder %s197, 63
      %s200 = scalar_select %p199, %s197, 63
      %p201 = scmp.lt.s32.totalorder %s198, 1
      %s202 = scalar_select %p201, %s198, 1
      %s203 = smul.addr %s200, 2
      %s204 = sadd.s32 %s202, %s203
      %s205 = smul.addr %s204, 4
      %s206 = scalar_lea.vmem %s0, %s205
      %p207 = pneg %p56
      %p208 = pneg %p53
      %s209 = smul.u32 32, %s21
      %p210 = scmp.lt.s32.totalorder %s209, 31
      %s211 = scalar_select %p210, %s209, 31
      %p212 = scmp.lt.s32.totalorder %s20, 0
      %s213 = scalar_select %p212, %s20, 0
      %s214 = sadd.s32 %s213, %s211
      %s215 = smul.addr %s214, 4
      %s216 = scalar_lea.vmem %s1, %s215
      %p217 = pneg %p84
      %p218 = pneg %p81
      %p219 = scmp.lt.s32.totalorder %s20, 0
      %s220 = scalar_select %p219, %s20, 0
      %s221 = scalar_lea.vmem %s2, %s220
      %p222 = pneg %p110
      %p223 = pneg %p107
      %p224 = pneg %p138
      %p225 = pneg %p135
      %s226 = smul.u32 32, %s19
      %p227 = scmp.lt.s32.totalorder %s226, 63
      %s228 = scalar_select %p227, %s226, 63
      %p229 = scmp.lt.s32.totalorder %s20, 0
      %s230 = scalar_select %p229, %s20, 0
      %s231 = sadd.s32 %s230, %s228
      %s232 = smul.addr %s231, 4
      %s233 = scalar_lea.vmem %s3, %s232
      %s234 = smul.u32 32, %s19
      %s235 = smul.u32 2, %s21
      %p236 = scmp.lt.s32.totalorder %s234, 63
      %s237 = scalar_select %p236, %s234, 63
      %p238 = scmp.lt.s32.totalorder %s235, 1
      %s239 = scalar_select %p238, %s235, 1
      %s240 = smul.addr %s237, 2
      %s241 = sadd.s32 %s239, %s240
      %s242 = smul.addr %s241, 4
      %s243 = scalar_lea.vmem %s0, %s242
      %s244 = smul.u32 32, %s19
      %s245 = smul.u32 2, %s21
      %s246 = smul.u32 32, %s21
      %p247 = scmp.lt.s32.totalorder %s246, 31
      %s248 = scalar_select %p247, %s246, 31
      %p249 = scmp.lt.s32.totalorder %s20, 0
      %s250 = scalar_select %p249, %s20, 0
      %s251 = sadd.s32 %s250, %s248
      %s252 = smul.addr %s251, 4
      %s253 = scalar_lea.vmem %s1, %s252
      %s254 = smul.u32 32, %s21
      %p255 = scmp.lt.s32.totalorder %s20, 0
      %s256 = scalar_select %p255, %s20, 0
      %s257 = scalar_lea.vmem %s2, %s256
      %s258 = smul.u32 32, %s19
      %p259 = scmp.lt.s32.totalorder %s258, 63
      %s260 = scalar_select %p259, %s258, 63
      %p261 = scmp.lt.s32.totalorder %s20, 0
      %s262 = scalar_select %p261, %s20, 0
      %s263 = sadd.s32 %s262, %s260
      %s264 = smul.addr %s263, 4
      %s265 = scalar_lea.vmem %s3, %s264
      %s266 = smul.u32 32, %s19
      %p268 = scmp.eq.s32.totalorder %s21, 0
      // Predicated region
      $region33: #{matmul_bias.1} parent=31 // pred_check
        %p269 = pneg %p268
      $region34: #{matmul_bias.1} parent=31 // pred_check_branch
        %271 = sbr.rel (%p269) target = $region36
      $region35: #{matmul_bias.1} parent=31 // pred_region
        %272 = vst [vmem:[#allocation2] sm:$0xff] 0.0
        %273 = vst [vmem:[#allocation2 + $0x8] sm:$0xff] 0.0
        %274 = vst [vmem:[#allocation2 + $0x10] sm:$0xff] 0.0
        %275 = vst [vmem:[#allocation2 + $0x18] sm:$0xff] 0.0
        %276 = vst [vmem:[#allocation2 + $0x20] sm:$0xff] 0.0
        %277 = vst [vmem:[#allocation2 + $0x28] sm:$0xff] 0.0
        %278 = vst [vmem:[#allocation2 + $0x30] sm:$0xff] 0.0
        %279 = vst [vmem:[#allocation2 + $0x38] sm:$0xff] 0.0
        %280 = vst [vmem:[#allocation2 + $0x40] sm:$0xff] 0.0
        %281 = vst [vmem:[#allocation2 + $0x48] sm:$0xff] 0.0
        %282 = vst [vmem:[#allocation2 + $0x50] sm:$0xff] 0.0
        %283 = vst [vmem:[#allocation2 + $0x58] sm:$0xff] 0.0
        %284 = vst [vmem:[#allocation2 + $0x60] sm:$0xff] 0.0
        %285 = vst [vmem:[#allocation2 + $0x68] sm:$0xff] 0.0
        %286 = vst [vmem:[#allocation2 + $0x70] sm:$0xff] 0.0
        %287 = vst [vmem:[#allocation2 + $0x78] sm:$0xff] 0.0
        %288 = vst [vmem:[#allocation2 + $0x80] sm:$0xff] 0.0
        %289 = vst [vmem:[#allocation2 + $0x88] sm:$0xff] 0.0
        %290 = vst [vmem:[#allocation2 + $0x90] sm:$0xff] 0.0
        %291 = vst [vmem:[#allocation2 + $0x98] sm:$0xff] 0.0
        %292 = vst [vmem:[#allocation2 + $0xa0] sm:$0xff] 0.0
        %293 = vst [vmem:[#allocation2 + $0xa8] sm:$0xff] 0.0
        %294 = vst [vmem:[#allocation2 + $0xb0] sm:$0xff] 0.0
        %295 = vst [vmem:[#allocation2 + $0xb8] sm:$0xff] 0.0
        %296 = vst [vmem:[#allocation2 + $0xc0] sm:$0xff] 0.0
        %297 = vst [vmem:[#allocation2 + $0xc8] sm:$0xff] 0.0
        %298 = vst [vmem:[#allocation2 + $0xd0] sm:$0xff] 0.0
        %299 = vst [vmem:[#allocation2 + $0xd8] sm:$0xff] 0.0
        %300 = vst [vmem:[#allocation2 + $0xe0] sm:$0xff] 0.0
        %301 = vst [vmem:[#allocation2 + $0xe8] sm:$0xff] 0.0
        %302 = vst [vmem:[#allocation2 + $0xf0] sm:$0xff] 0.0
        %303 = vst [vmem:[#allocation2 + $0xf8] sm:$0xff] 0.0
      $region36: #{matmul_bias.1} parent=31 // pred_fallthru
        _
      %v304 = vld [vmem:[#allocation2] sm:$0xff]
      %v305 = vld [vmem:[#allocation2 + $0x8] sm:$0xff]
      %v306 = vld [vmem:[#allocation2 + $0x10] sm:$0xff]
      %v307 = vld [vmem:[#allocation2 + $0x18] sm:$0xff]
      %v308 = vld [vmem:[#allocation2 + $0x20] sm:$0xff]
      %v309 = vld [vmem:[#allocation2 + $0x28] sm:$0xff]
      %v310 = vld [vmem:[#allocation2 + $0x30] sm:$0xff]
      %v311 = vld [vmem:[#allocation2 + $0x38] sm:$0xff]
      %v312 = vld [vmem:[#allocation2 + $0x40] sm:$0xff]
      %v313 = vld [vmem:[#allocation2 + $0x48] sm:$0xff]
      %v314 = vld [vmem:[#allocation2 + $0x50] sm:$0xff]
      %v315 = vld [vmem:[#allocation2 + $0x58] sm:$0xff]
      %v316 = vld [vmem:[#allocation2 + $0x60] sm:$0xff]
      %v317 = vld [vmem:[#allocation2 + $0x68] sm:$0xff]
      %v318 = vld [vmem:[#allocation2 + $0x70] sm:$0xff]
      %v319 = vld [vmem:[#allocation2 + $0x78] sm:$0xff]
      %v320 = vld [vmem:[#allocation2 + $0x80] sm:$0xff]
      %v321 = vld [vmem:[#allocation2 + $0x88] sm:$0xff]
      %v322 = vld [vmem:[#allocation2 + $0x90] sm:$0xff]
      %v323 = vld [vmem:[#allocation2 + $0x98] sm:$0xff]
      %v324 = vld [vmem:[#allocation2 + $0xa0] sm:$0xff]
      %v325 = vld [vmem:[#allocation2 + $0xa8] sm:$0xff]
      %v326 = vld [vmem:[#allocation2 + $0xb0] sm:$0xff]
      %v327 = vld [vmem:[#allocation2 + $0xb8] sm:$0xff]
      %v328 = vld [vmem:[#allocation2 + $0xc0] sm:$0xff]
      %v329 = vld [vmem:[#allocation2 + $0xc8] sm:$0xff]
      %v330 = vld [vmem:[#allocation2 + $0xd0] sm:$0xff]
      %v331 = vld [vmem:[#allocation2 + $0xd8] sm:$0xff]
      %v332 = vld [vmem:[#allocation2 + $0xe0] sm:$0xff]
      %v333 = vld [vmem:[#allocation2 + $0xe8] sm:$0xff]
      %v334 = vld [vmem:[#allocation2 + $0xf0] sm:$0xff]
      %v335 = vld [vmem:[#allocation2 + $0xf8] sm:$0xff]
      %v336 = vld [vmem:[%s243] sm:$0xff]
      %v337 = vld [vmem:[%s243 + $0x8] sm:$0xff]
      %v338 = vld [vmem:[%s243 + $0x10] sm:$0xff]
      %v339 = vld [vmem:[%s243 + $0x18] sm:$0xff]
      %v340 = vld [vmem:[%s243 + $0x20] sm:$0xff]
      %v341 = vld [vmem:[%s243 + $0x28] sm:$0xff]
      %v342 = vld [vmem:[%s243 + $0x30] sm:$0xff]
      %v343 = vld [vmem:[%s243 + $0x38] sm:$0xff]
      %v344 = vld [vmem:[%s243 + $0x40] sm:$0xff]
      %v345 = vld [vmem:[%s243 + $0x48] sm:$0xff]
      %v346 = vld [vmem:[%s243 + $0x50] sm:$0xff]
      %v347 = vld [vmem:[%s243 + $0x58] sm:$0xff]
      %v348 = vld [vmem:[%s243 + $0x60] sm:$0xff]
      %v349 = vld [vmem:[%s243 + $0x68] sm:$0xff]
      %v350 = vld [vmem:[%s243 + $0x70] sm:$0xff]
      %v351 = vld [vmem:[%s243 + $0x78] sm:$0xff]
      %v352 = vld [vmem:[%s243 + $0x80] sm:$0xff]
      %v353 = vld [vmem:[%s243 + $0x88] sm:$0xff]
      %v354 = vld [vmem:[%s243 + $0x90] sm:$0xff]
      %v355 = vld [vmem:[%s243 + $0x98] sm:$0xff]
      %v356 = vld [vmem:[%s243 + $0xa0] sm:$0xff]
      %v357 = vld [vmem:[%s243 + $0xa8] sm:$0xff]
      %v358 = vld [vmem:[%s243 + $0xb0] sm:$0xff]
      %v359 = vld [vmem:[%s243 + $0xb8] sm:$0xff]
      %v360 = vld [vmem:[%s243 + $0xc0] sm:$0xff]
      %v361 = vld [vmem:[%s243 + $0xc8] sm:$0xff]
      %v362 = vld [vmem:[%s243 + $0xd0] sm:$0xff]
      %v363 = vld [vmem:[%s243 + $0xd8] sm:$0xff]
      %v364 = vld [vmem:[%s243 + $0xe0] sm:$0xff]
      %v365 = vld [vmem:[%s243 + $0xe8] sm:$0xff]
      %v366 = vld [vmem:[%s243 + $0xf0] sm:$0xff]
      %v367 = vld [vmem:[%s243 + $0xf8] sm:$0xff]
      %v368 = vld [vmem:[%s253] sm:$0xf]
      %v369 = vld [vmem:[%s253 + $0x4] sm:$0xf]
      %v370 = vld [vmem:[%s253 + $0x8] sm:$0xf]
      %v371 = vld [vmem:[%s253 + $0xc] sm:$0xf]
      %v372 = vld [vmem:[%s253 + $0x10] sm:$0xf]
      %v373 = vld [vmem:[%s253 + $0x14] sm:$0xf]
      %v374 = vld [vmem:[%s253 + $0x18] sm:$0xf]
      %v375 = vld [vmem:[%s253 + $0x1c] sm:$0xf]
      %v376 = vld [vmem:[%s253 + $0x20] sm:$0xf]
      %v377 = vld [vmem:[%s253 + $0x24] sm:$0xf]
      %v378 = vld [vmem:[%s253 + $0x28] sm:$0xf]
      %v379 = vld [vmem:[%s253 + $0x2c] sm:$0xf]
      %v380 = vld [vmem:[%s253 + $0x30] sm:$0xf]
      %v381 = vld [vmem:[%s253 + $0x34] sm:$0xf]
      %v382 = vld [vmem:[%s253 + $0x38] sm:$0xf]
      %v383 = vld [vmem:[%s253 + $0x3c] sm:$0xf]
      %v384 = vld [vmem:[%s253 + $0x40] sm:$0xf]
      %v385 = vld [vmem:[%s253 + $0x44] sm:$0xf]
      %v386 = vld [vmem:[%s253 + $0x48] sm:$0xf]
      %v387 = vld [vmem:[%s253 + $0x4c] sm:$0xf]
      %v388 = vld [vmem:[%s253 + $0x50] sm:$0xf]
      %v389 = vld [vmem:[%s253 + $0x54] sm:$0xf]
      %v390 = vld [vmem:[%s253 + $0x58] sm:$0xf]
      %v391 = vld [vmem:[%s253 + $0x5c] sm:$0xf]
      %v392 = vld [vmem:[%s253 + $0x60] sm:$0xf]
      %v393 = vld [vmem:[%s253 + $0x64] sm:$0xf]
      %v394 = vld [vmem:[%s253 + $0x68] sm:$0xf]
      %v395 = vld [vmem:[%s253 + $0x6c] sm:$0xf]
      %v396 = vld [vmem:[%s253 + $0x70] sm:$0xf]
      %v397 = vld [vmem:[%s253 + $0x74] sm:$0xf]
      %v398 = vld [vmem:[%s253 + $0x78] sm:$0xf]
      %v399 = vld [vmem:[%s253 + $0x7c] sm:$0xf]
      %v432 = vunpack.c.l.b16 %v336
      %v433 = vunpack.c.h.b16 %v336
      %v434 = vunpack.c.l.b16 %v337
      %v435 = vunpack.c.h.b16 %v337
      %v436 = vunpack.c.l.b16 %v338
      %v437 = vunpack.c.h.b16 %v338
      %v438 = vunpack.c.l.b16 %v339
      %v439 = vunpack.c.h.b16 %v339
      %v440 = vunpack.c.l.b16 %v340
      %v441 = vunpack.c.h.b16 %v340
      %v442 = vunpack.c.l.b16 %v341
      %v443 = vunpack.c.h.b16 %v341
      %v444 = vunpack.c.l.b16 %v342
      %v445 = vunpack.c.h.b16 %v342
      %v446 = vunpack.c.l.b16 %v343
      %v447 = vunpack.c.h.b16 %v343
      %v448 = vunpack.c.l.b16 %v344
      %v449 = vunpack.c.h.b16 %v344
      %v450 = vunpack.c.l.b16 %v345
      %v451 = vunpack.c.h.b16 %v345
      %v452 = vunpack.c.l.b16 %v346
      %v453 = vunpack.c.h.b16 %v346
      %v454 = vunpack.c.l.b16 %v347
      %v455 = vunpack.c.h.b16 %v347
      %v456 = vunpack.c.l.b16 %v348
      %v457 = vunpack.c.h.b16 %v348
      %v458 = vunpack.c.l.b16 %v349
      %v459 = vunpack.c.h.b16 %v349
      %v460 = vunpack.c.l.b16 %v350
      %v461 = vunpack.c.h.b16 %v350
      %v462 = vunpack.c.l.b16 %v351
      %v463 = vunpack.c.h.b16 %v351
      %v464 = vunpack.c.l.b16 %v352
      %v465 = vunpack.c.h.b16 %v352
      %v466 = vunpack.c.l.b16 %v353
      %v467 = vunpack.c.h.b16 %v353
      %v468 = vunpack.c.l.b16 %v354
      %v469 = vunpack.c.h.b16 %v354
      %v470 = vunpack.c.l.b16 %v355
      %v471 = vunpack.c.h.b16 %v355
      %v472 = vunpack.c.l.b16 %v356
      %v473 = vunpack.c.h.b16 %v356
      %v474 = vunpack.c.l.b16 %v357
      %v475 = vunpack.c.h.b16 %v357
      %v476 = vunpack.c.l.b16 %v358
      %v477 = vunpack.c.h.b16 %v358
      %v478 = vunpack.c.l.b16 %v359
      %v479 = vunpack.c.h.b16 %v359
      %v480 = vunpack.c.l.b16 %v360
      %v481 = vunpack.c.h.b16 %v360
      %v482 = vunpack.c.l.b16 %v361
      %v483 = vunpack.c.h.b16 %v361
      %v484 = vunpack.c.l.b16 %v362
      %v485 = vunpack.c.h.b16 %v362
      %v486 = vunpack.c.l.b16 %v363
      %v487 = vunpack.c.h.b16 %v363
      %v488 = vunpack.c.l.b16 %v364
      %v489 = vunpack.c.h.b16 %v364
      %v490 = vunpack.c.l.b16 %v365
      %v491 = vunpack.c.h.b16 %v365
      %v492 = vunpack.c.l.b16 %v366
      %v493 = vunpack.c.h.b16 %v366
      %v494 = vunpack.c.l.b16 %v367
      %v495 = vunpack.c.h.b16 %v367
      %v496 = vpack.c.b16 %v434, %v432
      %v497 = vpack.c.b16 %v435, %v433
      %v498 = vpack.c.b16 %v438, %v436
      %v499 = vpack.c.b16 %v439, %v437
      %v500 = vpack.c.b16 %v442, %v440
      %v501 = vpack.c.b16 %v443, %v441
      %v502 = vpack.c.b16 %v446, %v444
      %v503 = vpack.c.b16 %v447, %v445
      %v504 = vpack.c.b16 %v450, %v448
      %v505 = vpack.c.b16 %v451, %v449
      %v506 = vpack.c.b16 %v454, %v452
      %v507 = vpack.c.b16 %v455, %v453
      %v508 = vpack.c.b16 %v458, %v456
      %v509 = vpack.c.b16 %v459, %v457
      %v510 = vpack.c.b16 %v462, %v460
      %v511 = vpack.c.b16 %v463, %v461
      %v512 = vpack.c.b16 %v466, %v464
      %v513 = vpack.c.b16 %v467, %v465
      %v514 = vpack.c.b16 %v470, %v468
      %v515 = vpack.c.b16 %v471, %v469
      %v516 = vpack.c.b16 %v474, %v472
      %v517 = vpack.c.b16 %v475, %v473
      %v518 = vpack.c.b16 %v478, %v476
      %v519 = vpack.c.b16 %v479, %v477
      %v520 = vpack.c.b16 %v482, %v480
      %v521 = vpack.c.b16 %v483, %v481
      %v522 = vpack.c.b16 %v486, %v484
      %v523 = vpack.c.b16 %v487, %v485
      %v524 = vpack.c.b16 %v490, %v488
      %v525 = vpack.c.b16 %v491, %v489
      %v526 = vpack.c.b16 %v494, %v492
      %v527 = vpack.c.b16 %v495, %v493
      %v592 = vunpack.c.l.b16 %v368
      %v593 = vunpack.c.l.b16 %v369
      %v594 = vunpack.c.l.b16 %v370
      %v595 = vunpack.c.l.b16 %v371
      %v596 = vunpack.c.l.b16 %v372
      %v597 = vunpack.c.l.b16 %v373
      %v598 = vunpack.c.l.b16 %v374
      %v599 = vunpack.c.l.b16 %v375
      %v600 = vunpack.c.l.b16 %v376
      %v601 = vunpack.c.l.b16 %v377
      %v602 = vunpack.c.l.b16 %v378
      %v603 = vunpack.c.l.b16 %v379
      %v604 = vunpack.c.l.b16 %v380
      %v605 = vunpack.c.l.b16 %v381
      %v606 = vunpack.c.l.b16 %v382
      %v607 = vunpack.c.l.b16 %v383
      %v608 = vunpack.c.l.b16 %v384
      %v609 = vunpack.c.l.b16 %v385
      %v610 = vunpack.c.l.b16 %v386
      %v611 = vunpack.c.l.b16 %v387
      %v612 = vunpack.c.l.b16 %v388
      %v613 = vunpack.c.l.b16 %v389
      %v614 = vunpack.c.l.b16 %v390
      %v615 = vunpack.c.l.b16 %v391
      %v616 = vunpack.c.l.b16 %v392
      %v617 = vunpack.c.l.b16 %v393
      %v618 = vunpack.c.l.b16 %v394
      %v619 = vunpack.c.l.b16 %v395
      %v620 = vunpack.c.l.b16 %v396
      %v621 = vunpack.c.l.b16 %v397
      %v622 = vunpack.c.l.b16 %v398
      %v623 = vunpack.c.l.b16 %v399
      %v624 = vpack.c.b16 %v593, %v592
      %v625 = vpack.c.b16 %v595, %v594
      %v626 = vpack.c.b16 %v597, %v596
      %v627 = vpack.c.b16 %v599, %v598
      %v628 = vpack.c.b16 %v601, %v600
      %v629 = vpack.c.b16 %v603, %v602
      %v630 = vpack.c.b16 %v605, %v604
      %v631 = vpack.c.b16 %v607, %v606
      %v632 = vpack.c.b16 %v609, %v608
      %v633 = vpack.c.b16 %v611, %v610
      %v634 = vpack.c.b16 %v613, %v612
      %v635 = vpack.c.b16 %v615, %v614
      %v636 = vpack.c.b16 %v617, %v616
      %v637 = vpack.c.b16 %v619, %v618
      %v638 = vpack.c.b16 %v621, %v620
      %v639 = vpack.c.b16 %v623, %v622
      %656 = vmatprep.subr.bf16.mxu0 0
      %657 = vmatpush1.bf16.msra.mxu0 %v624
      %658 = vmatprep.subr.bf16.mxu0 0
      %659 = vmatpush1.bf16.msra.mxu0 %v625
      %660 = vmatprep.subr.bf16.mxu0 0
      %661 = vmatpush1.bf16.msra.mxu0 %v626
      %662 = vmatprep.subr.bf16.mxu0 0
      %663 = vmatpush1.bf16.msra.mxu0 %v627
      %664 = vmatprep.subr.bf16.mxu0 0
      %665 = vmatpush1.bf16.msra.mxu0 %v628
      %666 = vmatprep.subr.bf16.mxu0 0
      %667 = vmatpush1.bf16.msra.mxu0 %v629
      %668 = vmatprep.subr.bf16.mxu0 0
      %669 = vmatpush1.bf16.msra.mxu0 %v630
      %670 = vmatprep.subr.bf16.mxu0 0
      %671 = vmatpush1.bf16.msra.mxu0 %v631
      %672 = vmatprep.subr.bf16.mxu0 0
      %673 = vmatpush1.bf16.msra.mxu0 %v632
      %674 = vmatprep.subr.bf16.mxu0 0
      %675 = vmatpush1.bf16.msra.mxu0 %v633
      %676 = vmatprep.subr.bf16.mxu0 0
      %677 = vmatpush1.bf16.msra.mxu0 %v634
      %678 = vmatprep.subr.bf16.mxu0 0
      %679 = vmatpush1.bf16.msra.mxu0 %v635
      %680 = vmatprep.subr.bf16.mxu0 0
      %681 = vmatpush1.bf16.msra.mxu0 %v636
      %682 = vmatprep.subr.bf16.mxu0 0
      %683 = vmatpush1.bf16.msra.mxu0 %v637
      %684 = vmatprep.subr.bf16.mxu0 0
      %685 = vmatpush1.bf16.msra.mxu0 %v638
      %686 = vmatprep.subr.bf16.mxu0 0
      %687 = vmatpush1.bf16.msra.mxu0 %v639
      %688 = vmatprep.mubr.bf16.mxu0 %v497
      %689 = vmatmul.mubr.bf16.gmra.mrb[0].mxu0 %v496
      %v690 = vpop.f32.mrb[0].mxu0
      %v691 = vadd.f32 0.0, %v690
      %v692 = vpop.f32.mrb[0].mxu0
      %v693 = vpop.f32.mrb[0].mxu0
      %v694 = vadd.f32 0.0, %v693
      %v695 = vpop.f32.mrb[0].mxu0
      %696 = vmatprep.mubr.bf16.mxu0 %v499
      %697 = vmatmul.mubr.bf16.gmra.mrb[0].mxu0 %v498
      %v698 = vpop.f32.mrb[0].mxu0
      %v699 = vadd.f32 0.0, %v698
      %v700 = vpop.f32.mrb[0].mxu0
      %v701 = vpop.f32.mrb[0].mxu0
      %v702 = vadd.f32 0.0, %v701
      %v703 = vpop.f32.mrb[0].mxu0
      %704 = vmatprep.mubr.bf16.mxu0 %v501
      %705 = vmatmul.mubr.bf16.gmra.mrb[0].mxu0 %v500
      %v706 = vpop.f32.mrb[0].mxu0
      %v707 = vadd.f32 0.0, %v706
      %v708 = vpop.f32.mrb[0].mxu0
      %v709 = vpop.f32.mrb[0].mxu0
      %v710 = vadd.f32 0.0, %v709
      %v711 = vpop.f32.mrb[0].mxu0
      %712 = vmatprep.mubr.bf16.mxu0 %v503
      %713 = vmatmul.mubr.bf16.gmra.mrb[0].mxu0 %v502
      %v714 = vpop.f32.mrb[0].mxu0
      %v715 = vadd.f32 0.0, %v714
      %v716 = vpop.f32.mrb[0].mxu0
      %v717 = vpop.f32.mrb[0].mxu0
      %v718 = vadd.f32 0.0, %v717
      %v719 = vpop.f32.mrb[0].mxu0
      %720 = vmatprep.mubr.bf16.mxu0 %v505
      %721 = vmatmul.mubr.bf16.gmra.mrb[0].mxu0 %v504
      %v722 = vpop.f32.mrb[0].mxu0
      %v723 = vadd.f32 0.0, %v722
      %v724 = vpop.f32.mrb[0].mxu0
      %v725 = vpop.f32.mrb[0].mxu0
      %v726 = vadd.f32 0.0, %v725
      %v727 = vpop.f32.mrb[0].mxu0
      %728 = vmatprep.mubr.bf16.mxu0 %v507
      %729 = vmatmul.mubr.bf16.gmra.mrb[0].mxu0 %v506
      %v730 = vpop.f32.mrb[0].mxu0
      %v731 = vadd.f32 0.0, %v730
      %v732 = vpop.f32.mrb[0].mxu0
      %v733 = vpop.f32.mrb[0].mxu0
      %v734 = vadd.f32 0.0, %v733
      %v735 = vpop.f32.mrb[0].mxu0
      %736 = vmatprep.mubr.bf16.mxu0 %v509
      %737 = vmatmul.mubr.bf16.gmra.mrb[0].mxu0 %v508
      %v738 = vpop.f32.mrb[0].mxu0
      %v739 = vadd.f32 0.0, %v738
      %v740 = vpop.f32.mrb[0].mxu0
      %v741 = vpop.f32.mrb[0].mxu0
      %v742 = vadd.f32 0.0, %v741
      %v743 = vpop.f32.mrb[0].mxu0
      %744 = vmatprep.mubr.bf16.mxu0 %v511
      %745 = vmatmul.mubr.bf16.gmra.mrb[0].mxu0 %v510
      %v746 = vpop.f32.mrb[0].mxu0
      %v747 = vadd.f32 0.0, %v746
      %v748 = vpop.f32.mrb[0].mxu0
      %v749 = vpop.f32.mrb[0].mxu0
      %v750 = vadd.f32 0.0, %v749
      %v751 = vpop.f32.mrb[0].mxu0
      %752 = vmatprep.mubr.bf16.mxu0 %v513
      %753 = vmatmul.mubr.bf16.gmra.mrb[0].mxu0 %v512
      %v754 = vpop.f32.mrb[0].mxu0
      %v755 = vadd.f32 0.0, %v754
      %v756 = vpop.f32.mrb[0].mxu0
      %v757 = vpop.f32.mrb[0].mxu0
      %v758 = vadd.f32 0.0, %v757
      %v759 = vpop.f32.mrb[0].mxu0
      %760 = vmatprep.mubr.bf16.mxu0 %v515
      %761 = vmatmul.mubr.bf16.gmra.mrb[0].mxu0 %v514
      %v762 = vpop.f32.mrb[0].mxu0
      %v763 = vadd.f32 0.0, %v762
      %v764 = vpop.f32.mrb[0].mxu0
      %v765 = vpop.f32.mrb[0].mxu0
      %v766 = vadd.f32 0.0, %v765
      %v767 = vpop.f32.mrb[0].mxu0
      %768 = vmatprep.mubr.bf16.mxu0 %v517
      %769 = vmatmul.mubr.bf16.gmra.mrb[0].mxu0 %v516
      %v770 = vpop.f32.mrb[0].mxu0
      %v771 = vadd.f32 0.0, %v770
      %v772 = vpop.f32.mrb[0].mxu0
      %v773 = vpop.f32.mrb[0].mxu0
      %v774 = vadd.f32 0.0, %v773
      %v775 = vpop.f32.mrb[0].mxu0
      %776 = vmatprep.mubr.bf16.mxu0 %v519
      %777 = vmatmul.mubr.bf16.gmra.mrb[0].mxu0 %v518
      %v778 = vpop.f32.mrb[0].mxu0
      %v779 = vadd.f32 0.0, %v778
      %v780 = vpop.f32.mrb[0].mxu0
      %v781 = vpop.f32.mrb[0].mxu0
      %v782 = vadd.f32 0.0, %v781
      %v783 = vpop.f32.mrb[0].mxu0
      %784 = vmatprep.mubr.bf16.mxu0 %v521
      %785 = vmatmul.mubr.bf16.gmra.mrb[0].mxu0 %v520
      %v786 = vpop.f32.mrb[0].mxu0
      %v787 = vadd.f32 0.0, %v786
      %v788 = vpop.f32.mrb[0].mxu0
      %v789 = vpop.f32.mrb[0].mxu0
      %v790 = vadd.f32 0.0, %v789
      %v791 = vpop.f32.mrb[0].mxu0
      %792 = vmatprep.mubr.bf16.mxu0 %v523
      %793 = vmatmul.mubr.bf16.gmra.mrb[0].mxu0 %v522
      %v794 = vpop.f32.mrb[0].mxu0
      %v795 = vadd.f32 0.0, %v794
      %v796 = vpop.f32.mrb[0].mxu0
      %v797 = vpop.f32.mrb[0].mxu0
      %v798 = vadd.f32 0.0, %v797
      %v799 = vpop.f32.mrb[0].mxu0
      %800 = vmatprep.mubr.bf16.mxu0 %v525
      %801 = vmatmul.mubr.bf16.gmra.mrb[0].mxu0 %v524
      %v802 = vpop.f32.mrb[0].mxu0
      %v803 = vadd.f32 0.0, %v802
      %v804 = vpop.f32.mrb[0].mxu0
      %v805 = vpop.f32.mrb[0].mxu0
      %v806 = vadd.f32 0.0, %v805
      %v807 = vpop.f32.mrb[0].mxu0
      %808 = vmatprep.mubr.bf16.mxu0 %v527
      %809 = vmatmul.mubr.bf16.gmra.mrb[0].mxu0 %v526
      %v810 = vpop.f32.mrb[0].mxu0
      %v811 = vadd.f32 0.0, %v810
      %v812 = vpop.f32.mrb[0].mxu0
      %v813 = vpop.f32.mrb[0].mxu0
      %v814 = vadd.f32 0.0, %v813
      %v815 = vpop.f32.mrb[0].mxu0
      %816 = vdwg.mxu0
      %v817 = vadd.f32 %v304, %v691
      %v818 = vadd.f32 %v305, %v694
      %v819 = vadd.f32 %v306, %v699
      %v820 = vadd.f32 %v307, %v702
      %v821 = vadd.f32 %v308, %v707
      %v822 = vadd.f32 %v309, %v710
      %v823 = vadd.f32 %v310, %v715
      %v824 = vadd.f32 %v311, %v718
      %v825 = vadd.f32 %v312, %v723
      %v826 = vadd.f32 %v313, %v726
      %v827 = vadd.f32 %v314, %v731
      %v828 = vadd.f32 %v315, %v734
      %v829 = vadd.f32 %v316, %v739
      %v830 = vadd.f32 %v317, %v742
      %v831 = vadd.f32 %v318, %v747
      %v832 = vadd.f32 %v319, %v750
      %v833 = vadd.f32 %v320, %v755
      %v834 = vadd.f32 %v321, %v758
      %v835 = vadd.f32 %v322, %v763
      %v836 = vadd.f32 %v323, %v766
      %v837 = vadd.f32 %v324, %v771
      %v838 = vadd.f32 %v325, %v774
      %v839 = vadd.f32 %v326, %v779
      %v840 = vadd.f32 %v327, %v782
      %v841 = vadd.f32 %v328, %v787
      %v842 = vadd.f32 %v329, %v790
      %v843 = vadd.f32 %v330, %v795
      %v844 = vadd.f32 %v331, %v798
      %v845 = vadd.f32 %v332, %v803
      %v846 = vadd.f32 %v333, %v806
      %v847 = vadd.f32 %v334, %v811
      %v848 = vadd.f32 %v335, %v814
      %849 = vst [vmem:[#allocation2] sm:$0xff] %v817
      %850 = vst [vmem:[#allocation2 + $0x8] sm:$0xff] %v818
      %851 = vst [vmem:[#allocation2 + $0x10] sm:$0xff] %v819
      %852 = vst [vmem:[#allocation2 + $0x18] sm:$0xff] %v820
      %853 = vst [vmem:[#allocation2 + $0x20] sm:$0xff] %v821
      %854 = vst [vmem:[#allocation2 + $0x28] sm:$0xff] %v822
      %855 = vst [vmem:[#allocation2 + $0x30] sm:$0xff] %v823
      %856 = vst [vmem:[#allocation2 + $0x38] sm:$0xff] %v824
      %857 = vst [vmem:[#allocation2 + $0x40] sm:$0xff] %v825
      %858 = vst [vmem:[#allocation2 + $0x48] sm:$0xff] %v826
      %859 = vst [vmem:[#allocation2 + $0x50] sm:$0xff] %v827
      %860 = vst [vmem:[#allocation2 + $0x58] sm:$0xff] %v828
      %861 = vst [vmem:[#allocation2 + $0x60] sm:$0xff] %v829
      %862 = vst [vmem:[#allocation2 + $0x68] sm:$0xff] %v830
      %863 = vst [vmem:[#allocation2 + $0x70] sm:$0xff] %v831
      %864 = vst [vmem:[#allocation2 + $0x78] sm:$0xff] %v832
      %865 = vst [vmem:[#allocation2 + $0x80] sm:$0xff] %v833
      %866 = vst [vmem:[#allocation2 + $0x88] sm:$0xff] %v834
      %867 = vst [vmem:[#allocation2 + $0x90] sm:$0xff] %v835
      %868 = vst [vmem:[#allocation2 + $0x98] sm:$0xff] %v836
      %869 = vst [vmem:[#allocation2 + $0xa0] sm:$0xff] %v837
      %870 = vst [vmem:[#allocation2 + $0xa8] sm:$0xff] %v838
      %871 = vst [vmem:[#allocation2 + $0xb0] sm:$0xff] %v839
      %872 = vst [vmem:[#allocation2 + $0xb8] sm:$0xff] %v840
      %873 = vst [vmem:[#allocation2 + $0xc0] sm:$0xff] %v841
      %874 = vst [vmem:[#allocation2 + $0xc8] sm:$0xff] %v842
      %875 = vst [vmem:[#allocation2 + $0xd0] sm:$0xff] %v843
      %876 = vst [vmem:[#allocation2 + $0xd8] sm:$0xff] %v844
      %877 = vst [vmem:[#allocation2 + $0xe0] sm:$0xff] %v845
      %878 = vst [vmem:[#allocation2 + $0xe8] sm:$0xff] %v846
      %879 = vst [vmem:[#allocation2 + $0xf0] sm:$0xff] %v847
      %880 = vst [vmem:[#allocation2 + $0xf8] sm:$0xff] %v848
      // Predicated region
      $region37: #{matmul_bias.1} parent=31 // pred_check
        %p881 = pneg %p268
      $region38: #{matmul_bias.1} parent=31 // pred_check_branch
        %883 = sbr.rel (%p881) target = $region40
      $region39: #{matmul_bias.1} parent=31 // pred_region
        %v884 = vld [vmem:[#allocation2] sm:$0xff]
        %v885 = vld [vmem:[#allocation2 + $0x8] sm:$0xff]
        %v886 = vld [vmem:[#allocation2 + $0x10] sm:$0xff]
        %v887 = vld [vmem:[#allocation2 + $0x18] sm:$0xff]
        %v888 = vld [vmem:[#allocation2 + $0x20] sm:$0xff]
        %v889 = vld [vmem:[#allocation2 + $0x28] sm:$0xff]
        %v890 = vld [vmem:[#allocation2 + $0x30] sm:$0xff]
        %v891 = vld [vmem:[#allocation2 + $0x38] sm:$0xff]
        %v892 = vld [vmem:[#allocation2 + $0x40] sm:$0xff]
        %v893 = vld [vmem:[#allocation2 + $0x48] sm:$0xff]
        %v894 = vld [vmem:[#allocation2 + $0x50] sm:$0xff]
        %v895 = vld [vmem:[#allocation2 + $0x58] sm:$0xff]
        %v896 = vld [vmem:[#allocation2 + $0x60] sm:$0xff]
        %v897 = vld [vmem:[#allocation2 + $0x68] sm:$0xff]
        %v898 = vld [vmem:[#allocation2 + $0x70] sm:$0xff]
        %v899 = vld [vmem:[#allocation2 + $0x78] sm:$0xff]
        %v900 = vld [vmem:[#allocation2 + $0x80] sm:$0xff]
        %v901 = vld [vmem:[#allocation2 + $0x88] sm:$0xff]
        %v902 = vld [vmem:[#allocation2 + $0x90] sm:$0xff]
        %v903 = vld [vmem:[#allocation2 + $0x98] sm:$0xff]
        %v904 = vld [vmem:[#allocation2 + $0xa0] sm:$0xff]
        %v905 = vld [vmem:[#allocation2 + $0xa8] sm:$0xff]
        %v906 = vld [vmem:[#allocation2 + $0xb0] sm:$0xff]
        %v907 = vld [vmem:[#allocation2 + $0xb8] sm:$0xff]
        %v908 = vld [vmem:[#allocation2 + $0xc0] sm:$0xff]
        %v909 = vld [vmem:[#allocation2 + $0xc8] sm:$0xff]
        %v910 = vld [vmem:[#allocation2 + $0xd0] sm:$0xff]
        %v911 = vld [vmem:[#allocation2 + $0xd8] sm:$0xff]
        %v912 = vld [vmem:[#allocation2 + $0xe0] sm:$0xff]
        %v913 = vld [vmem:[#allocation2 + $0xe8] sm:$0xff]
        %v914 = vld [vmem:[#allocation2 + $0xf0] sm:$0xff]
        %v915 = vld [vmem:[#allocation2 + $0xf8] sm:$0xff]
        %v916 = vld [vmem:[%s257] sm:$0x1]
        %v918 = vlaneseq
        %v919 = vshrl.u32 %v918, 7
        %v920 = vsub.s32 0, %v919
        %v921 = vrot.slane %v916, %v920
        %v923 = vadd.f32 %v884, %v921
        %v924 = vadd.f32 %v885, %v921
        %v925 = vadd.f32 %v886, %v921
        %v926 = vadd.f32 %v887, %v921
        %v927 = vadd.f32 %v888, %v921
        %v928 = vadd.f32 %v889, %v921
        %v929 = vadd.f32 %v890, %v921
        %v930 = vadd.f32 %v891, %v921
        %v931 = vadd.f32 %v892, %v921
        %v932 = vadd.f32 %v893, %v921
        %v933 = vadd.f32 %v894, %v921
        %v934 = vadd.f32 %v895, %v921
        %v935 = vadd.f32 %v896, %v921
        %v936 = vadd.f32 %v897, %v921
        %v937 = vadd.f32 %v898, %v921
        %v938 = vadd.f32 %v899, %v921
        %v939 = vadd.f32 %v900, %v921
        %v940 = vadd.f32 %v901, %v921
        %v941 = vadd.f32 %v902, %v921
        %v942 = vadd.f32 %v903, %v921
        %v943 = vadd.f32 %v904, %v921
        %v944 = vadd.f32 %v905, %v921
        %v945 = vadd.f32 %v906, %v921
        %v946 = vadd.f32 %v907, %v921
        %v947 = vadd.f32 %v908, %v921
        %v948 = vadd.f32 %v909, %v921
        %v949 = vadd.f32 %v910, %v921
        %v950 = vadd.f32 %v911, %v921
        %v951 = vadd.f32 %v912, %v921
        %v952 = vadd.f32 %v913, %v921
        %v953 = vadd.f32 %v914, %v921
        %v954 = vadd.f32 %v915, %v921
        %v955 = vmax.f32 %v923, 0.0
        %v956 = vmax.f32 %v924, 0.0
        %v957 = vmax.f32 %v925, 0.0
        %v958 = vmax.f32 %v926, 0.0
        %v959 = vmax.f32 %v927, 0.0
        %v960 = vmax.f32 %v928, 0.0
        %v961 = vmax.f32 %v929, 0.0
        %v962 = vmax.f32 %v930, 0.0
        %v963 = vmax.f32 %v931, 0.0
        %v964 = vmax.f32 %v932, 0.0
        %v965 = vmax.f32 %v933, 0.0
        %v966 = vmax.f32 %v934, 0.0
        %v967 = vmax.f32 %v935, 0.0
        %v968 = vmax.f32 %v936, 0.0
        %v969 = vmax.f32 %v937, 0.0
        %v970 = vmax.f32 %v938, 0.0
        %v971 = vmax.f32 %v939, 0.0
        %v972 = vmax.f32 %v940, 0.0
        %v973 = vmax.f32 %v941, 0.0
        %v974 = vmax.f32 %v942, 0.0
        %v975 = vmax.f32 %v943, 0.0
        %v976 = vmax.f32 %v944, 0.0
        %v977 = vmax.f32 %v945, 0.0
        %v978 = vmax.f32 %v946, 0.0
        %v979 = vmax.f32 %v947, 0.0
        %v980 = vmax.f32 %v948, 0.0
        %v981 = vmax.f32 %v949, 0.0
        %v982 = vmax.f32 %v950, 0.0
        %v983 = vmax.f32 %v951, 0.0
        %v984 = vmax.f32 %v952, 0.0
        %v985 = vmax.f32 %v953, 0.0
        %v986 = vmax.f32 %v954, 0.0
        %v987 = vpack.c.bf16 %v956, %v955
        %v988 = vpack.c.bf16 %v958, %v957
        %v989 = vpack.c.bf16 %v960, %v959
        %v990 = vpack.c.bf16 %v962, %v961
        %v991 = vpack.c.bf16 %v964, %v963
        %v992 = vpack.c.bf16 %v966, %v965
        %v993 = vpack.c.bf16 %v968, %v967
        %v994 = vpack.c.bf16 %v970, %v969
        %v995 = vpack.c.bf16 %v972, %v971
        %v996 = vpack.c.bf16 %v974, %v973
        %v997 = vpack.c.bf16 %v976, %v975
        %v998 = vpack.c.bf16 %v978, %v977
        %v999 = vpack.c.bf16 %v980, %v979
        %v1000 = vpack.c.bf16 %v982, %v981
        %v1001 = vpack.c.bf16 %v984, %v983
        %v1002 = vpack.c.bf16 %v986, %v985
        %v1019 = vunpack.c.l.b16 %v987
        %v1020 = vunpack.c.h.b16 %v987
        %v1021 = vunpack.c.l.b16 %v988
        %v1022 = vunpack.c.h.b16 %v988
        %v1023 = vunpack.c.l.b16 %v989
        %v1024 = vunpack.c.h.b16 %v989
        %v1025 = vunpack.c.l.b16 %v990
        %v1026 = vunpack.c.h.b16 %v990
        %v1027 = vunpack.c.l.b16 %v991
        %v1028 = vunpack.c.h.b16 %v991
        %v1029 = vunpack.c.l.b16 %v992
        %v1030 = vunpack.c.h.b16 %v992
        %v1031 = vunpack.c.l.b16 %v993
        %v1032 = vunpack.c.h.b16 %v993
        %v1033 = vunpack.c.l.b16 %v994
        %v1034 = vunpack.c.h.b16 %v994
        %v1035 = vunpack.c.l.b16 %v995
        %v1036 = vunpack.c.h.b16 %v995
        %v1037 = vunpack.c.l.b16 %v996
        %v1038 = vunpack.c.h.b16 %v996
        %v1039 = vunpack.c.l.b16 %v997
        %v1040 = vunpack.c.h.b16 %v997
        %v1041 = vunpack.c.l.b16 %v998
        %v1042 = vunpack.c.h.b16 %v998
        %v1043 = vunpack.c.l.b16 %v999
        %v1044 = vunpack.c.h.b16 %v999
        %v1045 = vunpack.c.l.b16 %v1000
        %v1046 = vunpack.c.h.b16 %v1000
        %v1047 = vunpack.c.l.b16 %v1001
        %v1048 = vunpack.c.h.b16 %v1001
        %v1049 = vunpack.c.l.b16 %v1002
        %v1050 = vunpack.c.h.b16 %v1002
        %v1051 = vpack.c.b16 %v1019, %v1019
        %v1052 = vpack.c.b16 %v1020, %v1020
        %v1053 = vpack.c.b16 %v1021, %v1021
        %v1054 = vpack.c.b16 %v1022, %v1022
        %v1055 = vpack.c.b16 %v1023, %v1023
        %v1056 = vpack.c.b16 %v1024, %v1024
        %v1057 = vpack.c.b16 %v1025, %v1025
        %v1058 = vpack.c.b16 %v1026, %v1026
        %v1059 = vpack.c.b16 %v1027, %v1027
        %v1060 = vpack.c.b16 %v1028, %v1028
        %v1061 = vpack.c.b16 %v1029, %v1029
        %v1062 = vpack.c.b16 %v1030, %v1030
        %v1063 = vpack.c.b16 %v1031, %v1031
        %v1064 = vpack.c.b16 %v1032, %v1032
        %v1065 = vpack.c.b16 %v1033, %v1033
        %v1066 = vpack.c.b16 %v1034, %v1034
        %v1067 = vpack.c.b16 %v1035, %v1035
        %v1068 = vpack.c.b16 %v1036, %v1036
        %v1069 = vpack.c.b16 %v1037, %v1037
        %v1070 = vpack.c.b16 %v1038, %v1038
        %v1071 = vpack.c.b16 %v1039, %v1039
        %v1072 = vpack.c.b16 %v1040, %v1040
        %v1073 = vpack.c.b16 %v1041, %v1041
        %v1074 = vpack.c.b16 %v1042, %v1042
        %v1075 = vpack.c.b16 %v1043, %v1043
        %v1076 = vpack.c.b16 %v1044, %v1044
        %v1077 = vpack.c.b16 %v1045, %v1045
        %v1078 = vpack.c.b16 %v1046, %v1046
        %v1079 = vpack.c.b16 %v1047, %v1047
        %v1080 = vpack.c.b16 %v1048, %v1048
        %v1081 = vpack.c.b16 %v1049, %v1049
        %v1082 = vpack.c.b16 %v1050, %v1050
        %1115 = vst [vmem:[%s265] sm:$0xf] %v1051
        %1116 = vst [vmem:[%s265 + $0x4] sm:$0xf] %v1052
        %1117 = vst [vmem:[%s265 + $0x8] sm:$0xf] %v1053
        %1118 = vst [vmem:[%s265 + $0xc] sm:$0xf] %v1054
        %1119 = vst [vmem:[%s265 + $0x10] sm:$0xf] %v1055
        %1120 = vst [vmem:[%s265 + $0x14] sm:$0xf] %v1056
        %1121 = vst [vmem:[%s265 + $0x18] sm:$0xf] %v1057
        %1122 = vst [vmem:[%s265 + $0x1c] sm:$0xf] %v1058
        %1123 = vst [vmem:[%s265 + $0x20] sm:$0xf] %v1059
        %1124 = vst [vmem:[%s265 + $0x24] sm:$0xf] %v1060
        %1125 = vst [vmem:[%s265 + $0x28] sm:$0xf] %v1061
        %1126 = vst [vmem:[%s265 + $0x2c] sm:$0xf] %v1062
        %1127 = vst [vmem:[%s265 + $0x30] sm:$0xf] %v1063
        %1128 = vst [vmem:[%s265 + $0x34] sm:$0xf] %v1064
        %1129 = vst [vmem:[%s265 + $0x38] sm:$0xf] %v1065
        %1130 = vst [vmem:[%s265 + $0x3c] sm:$0xf] %v1066
        %1131 = vst [vmem:[%s265 + $0x40] sm:$0xf] %v1067
        %1132 = vst [vmem:[%s265 + $0x44] sm:$0xf] %v1068
        %1133 = vst [vmem:[%s265 + $0x48] sm:$0xf] %v1069
        %1134 = vst [vmem:[%s265 + $0x4c] sm:$0xf] %v1070
        %1135 = vst [vmem:[%s265 + $0x50] sm:$0xf] %v1071
        %1136 = vst [vmem:[%s265 + $0x54] sm:$0xf] %v1072
        %1137 = vst [vmem:[%s265 + $0x58] sm:$0xf] %v1073
        %1138 = vst [vmem:[%s265 + $0x5c] sm:$0xf] %v1074
        %1139 = vst [vmem:[%s265 + $0x60] sm:$0xf] %v1075
        %1140 = vst [vmem:[%s265 + $0x64] sm:$0xf] %v1076
        %1141 = vst [vmem:[%s265 + $0x68] sm:$0xf] %v1077
        %1142 = vst [vmem:[%s265 + $0x6c] sm:$0xf] %v1078
        %1143 = vst [vmem:[%s265 + $0x70] sm:$0xf] %v1079
        %1144 = vst [vmem:[%s265 + $0x74] sm:$0xf] %v1080
        %1145 = vst [vmem:[%s265 + $0x78] sm:$0xf] %v1081
        %1146 = vst [vmem:[%s265 + $0x7c] sm:$0xf] %v1082
      $region40: #{matmul_bias.1} parent=31 // pred_fallthru
        _
      %s1147 = smul.u32 32, %s19
      %p1148 = scmp.lt.s32.totalorder %s1147, 63
      %s1149 = scalar_select %p1148, %s1147, 63
      %p1150 = scmp.lt.s32.totalorder %s20, 0
      %s1151 = scalar_select %p1150, %s20, 0
      %s1152 = sadd.s32 %s1151, %s1149
      %s1153 = smul.addr %s1152, 4
      %s1154 = scalar_lea.vmem %s3, %s1153
      // Predicated region
      $region41: #{matmul_bias.1} parent=31 // pred_check
        %p1155 = pneg %p135
      $region42: #{matmul_bias.1} parent=31 // pred_check_branch
        %1157 = sbr.rel (%p1155) target = $region44
      $region43: #{matmul_bias.1} parent=31 // pred_region
        %s1158 = smul.u32 32, %s19
      $region44: #{matmul_bias.1} parent=31 // pred_fallthru
        _
    $region32: #{matmul_bias.1} parent=5 // pred_fallthru
      _
    %p1159 = scmp.le.s32.totalorder 2, %s9
    // Predicated region
    $region45: #{matmul_bias.1} parent=5 // pred_check
      %p1160 = pneg %p1159
    $region46: #{matmul_bias.1} parent=5 // pred_check_branch
      %1162 = sbr.rel (%p1160) target = $region48
    $region47: #{matmul_bias.1} parent=5 // pred_region
      %s1163 = ssub.s32 %s9, 2
      // Predicated region
      $region49: #{matmul_bias.1} parent=47 // pred_check
        %p1164 = pneg %p141
      $region50: #{matmul_bias.1} parent=47 // pred_check_branch
        %1166 = sbr.rel (%p1164) target = $region52
      $region51: #{matmul_bias.1} parent=47 // pred_region
        %s1167 = smul.u32 32, %s22
        %p1168 = scmp.lt.s32.totalorder %s1167, 63
        %s1169 = scalar_select %p1168, %s1167, 63
        %p1170 = scmp.lt.s32.totalorder %s23, 0
        %s1171 = scalar_select %p1170, %s23, 0
        %s1172 = sadd.s32 %s1171, %s1169
        %s1173 = smul.addr %s1172, 4
        %s1174 = scalar_lea.vmem %s3, %s1173
      $region52: #{matmul_bias.1} parent=47 // pred_fallthru
        _
    $region48: #{matmul_bias.1} parent=5 // pred_fallthru
      _
  $region6: #{matmul_bias.1} parent=0 // loop_footer
    %s13 = sadd.s32 1, %s9
  $region7: #{matmul_bias.1} parent=0 // loop_footer_branch
    %8 = sbr.rel target = $region3
  $region8: #{matmul_bias.1} parent=0 // loop_exit
    _

</llo_original>
